<compile_context>
chip_gen: v7x
topology: tpu7x:2x2x1
jax: 0.10.0
libtpu: 0.0.40
codegen_flags: <defaults>
</compile_context>

<pallas_src>
import functools

import jax
import jax.numpy as jnp
from jax import lax
from jax.experimental import pallas as pl
from jax.experimental.pallas import tpu as pltpu

EMBEDDING_DIMENSION = 100
BLOCK_SIZE = 32
NEG_INF = -1e30


def head_kernel(x_ref, wqkv_ref, o_ref, *, head_size, scale):
    # x_ref:    (Bb, T_pad, C_pad)
    # wqkv_ref: (C_pad, 3*H)   -- [Wk | Wq | Wv], pre-transposed
    # o_ref:    (Bb, T_pad, H)
    H = head_size
    Bb, T_pad, C_pad = x_ref.shape

    # Fused QKV projection for every batch in this block: one MXU matmul.
    # Merging (Bb, T_pad) -> Bb*T_pad keeps lanes untouched and T_pad % 8 == 0,
    # so the reshape is tile-aligned (no relayout copy).
    x2 = x_ref[...].reshape(Bb * T_pad, C_pad)
    qkv = jnp.dot(x2, wqkv_ref[...], preferred_element_type=jnp.float32)
    qkv = qkv.reshape(Bb, T_pad, 3 * H)

    k = qkv[:, :, 0:H]
    q = qkv[:, :, H:2 * H]
    v = qkv[:, :, 2 * H:3 * H]

    # Additive causal bias, computed ONCE per grid step and broadcast over the
    # batch dim (JAX does not CSE broadcast_in_dim, so keep it hoisted).
    row = lax.broadcasted_iota(jnp.int32, (T_pad, T_pad), 0)
    col = lax.broadcasted_iota(jnp.int32, (T_pad, T_pad), 1)
    bias = jnp.where(col <= row, 0.0, NEG_INF).astype(jnp.float32)

    # Batched q @ k^T, contracting the head dim (no explicit transpose / XLU).
    wei = jnp.einsum("bqh,bkh->bqk", q, k, preferred_element_type=jnp.float32)
    # Scale uses C = embedding dim (matches the PyTorch reference), additive mask.
    wei = wei * scale + bias[None, :, :]

    # Softmax with EUP reciprocal (frees VALU slots).
    m = jnp.max(wei, axis=-1, keepdims=True)
    p = jnp.exp(wei - m)
    denom = jnp.sum(p, axis=-1, keepdims=True)
    attn = p * pl.reciprocal(denom, approx=True)

    out = jnp.einsum("bqk,bkh->bqh", attn, v, preferred_element_type=jnp.float32)
    o_ref[...] = out.astype(o_ref.dtype)


def head_forward(x, wk, wq, wv, *, batch_block=None):
    """Single-head causal self-attention.

    x:  (B, T, C) float32
    wk, wq, wv: (C, H) float32  (transposed nn.Linear weights, no bias)
    returns: (B, T, H) float32
    """
    B, T, C = x.shape
    H = wk.shape[1]
    assert T <= BLOCK_SIZE and C == EMBEDDING_DIMENSION

    # Pad C to a full 128-lane width and T to a sublane multiple of 8.
    C_pad = max(128, pl.cdiv(C, 128) * 128)
    T_pad = max(8, pl.cdiv(T, 8) * 8)

    if batch_block is None:
        # Keep >=2 grid steps when B>=2 (both megacore TCs get work) while
        # amortizing per-step overhead when B is large.
        batch_block = max(1, min(8, B // 2))
    B_pad = pl.cdiv(B, batch_block) * batch_block
    grid_b = B_pad // batch_block

    # Zero-pad: padded C columns hit zero weight rows, padded T rows / batches
    # are sliced away at the end, padded key columns are causally masked.
    x_p = jnp.pad(x.astype(jnp.float32),
                  ((0, B_pad - B), (0, T_pad - T), (0, C_pad - C)))

    # Fused, pre-transposed QKV weight: (C_pad, 3H).
    wqkv = jnp.concatenate([wk, wq, wv], axis=1).astype(jnp.float32)
    wqkv = jnp.pad(wqkv, ((0, C_pad - C), (0, 0)))

    scale = float(C) ** -0.5  # PyTorch reference scales by C**-0.5 (embedding dim)

    kernel = functools.partial(head_kernel, head_size=H, scale=scale)

    flops = B_pad * (2 * T_pad * C_pad * 3 * H + 4 * T_pad * T_pad * H)
    bytes_accessed = 4 * (B_pad * T_pad * C_pad + C_pad * 3 * H + B_pad * T_pad * H)

    out = pl.pallas_call(
        kernel,
        out_shape=jax.ShapeDtypeStruct((B_pad, T_pad, H), jnp.float32),
        grid_spec=pltpu.PrefetchScalarGridSpec(
            num_scalar_prefetch=0,
            grid=(grid_b,),
            in_specs=[
                pl.BlockSpec((batch_block, T_pad, C_pad), lambda b: (b, 0, 0)),
                pl.BlockSpec((C_pad, 3 * H), lambda b: (0, 0)),
            ],
            out_specs=pl.BlockSpec((batch_block, T_pad, H), lambda b: (b, 0, 0)),
        ),
        compiler_params=pltpu.CompilerParams(
            dimension_semantics=("parallel",),
        ),
        cost_estimate=pl.CostEstimate(
            flops=flops,
            transcendentals=B_pad * T_pad * T_pad,
            bytes_accessed=bytes_accessed,
        ),
    )(x_p, wqkv)

    return out[:B, :T, :]


def reference(x, wk, wq, wv):
    B, T, C = x.shape
    k = x @ wk
    q = x @ wq
    v = x @ wv
    wei = jnp.einsum("btd,bsd->bts", q, k) * (C ** -0.5)
    mask = jnp.tril(jnp.ones((T, T), bool))
    wei = jnp.where(mask, wei, -jnp.inf)
    wei = jax.nn.softmax(wei, axis=-1)
    return jnp.einsum("bts,bsd->btd", wei, v)


if __name__ == "__main__":
    B, T, C, H = 2, 8, EMBEDDING_DIMENSION, 16   # head_size = 16

    key = jax.random.PRNGKey(0)
    kx, kk, kq, kv = jax.random.split(key, 4)

    x = jax.random.normal(kx, (B, T, C), dtype=jnp.float32)
    # Deterministic nn.Linear-like init (uniform), stored pre-transposed (C, H)
    bound = 1.0 / (C ** 0.5)
    wk = jax.random.uniform(kk, (C, H), jnp.float32, -bound, bound)
    wq = jax.random.uniform(kq, (C, H), jnp.float32, -bound, bound)
    wv = jax.random.uniform(kv, (C, H), jnp.float32, -bound, bound)

    out = jax.jit(head_forward)(x, wk, wq, wv)
    jax.block_until_ready(out)

    ref = reference(x, wk, wq, wv)
    assert out.shape == (B, T, H)
    # Tolerance accounts for the EUP approx reciprocal (~1e-4 relative error).
    assert jnp.allclose(out, ref, atol=2e-3, rtol=2e-3), float(
        jnp.max(jnp.abs(out - ref)))
    print("KERNEL_OK")
</pallas_src>

<mosaic_0001>
module attributes {stable_mosaic.version = 11 : i64} {
  func.func @head_kernel(%arg0: i32, %arg1: memref<1x8x128xf32, #tpu.memory_space<vmem>>, %arg2: memref<128x48xf32, #tpu.memory_space<vmem>>, %arg3: memref<1x8x16xf32, #tpu.memory_space<vmem>>) attributes {dimension_semantics = [#tpu.dimension_semantics<parallel>], iteration_bounds = array<i64: 2>, scalar_prefetch = 0 : i64, scratch_operands = 0 : i64, tpu.core_type = #tpu.core_type<tc>, window_params = [{transform_indices = @transform_0, window_bounds = array<i64: 1, 8, 128>}, {pipeline_mode = #tpu.pipeline_mode<synchronous>, transform_indices = @transform_1, window_bounds = array<i64: 128, 48>}, {transform_indices = @transform_2, window_bounds = array<i64: 1, 8, 16>}]} {
    %c0 = arith.constant 0 : index
    %c0_0 = arith.constant 0 : index
    %c0_1 = arith.constant 0 : index
    %0 = vector.load %arg1[%c0, %c0_0, %c0_1] : memref<1x8x128xf32, #tpu.memory_space<vmem>>, vector<1x8x128xf32>
    %1 = vector.shape_cast %0 : vector<1x8x128xf32> to vector<8x128xf32>
    %c0_2 = arith.constant 0 : index
    %c0_3 = arith.constant 0 : index
    %2 = vector.load %arg2[%c0_2, %c0_3] : memref<128x48xf32, #tpu.memory_space<vmem>>, vector<128x48xf32>
    %cst = arith.constant dense<0.000000e+00> : vector<8x48xf32>
    %3 = tpu.matmul %1, %2, %cst {dimension_numbers = #tpu.dot_dimension_numbers<[1], [0], [0], [1], [0, 0, 1, 1], [], []>} : vector<8x128xf32>, vector<128x48xf32>, vector<8x48xf32> -> vector<8x48xf32>
    %4 = vector.shape_cast %3 : vector<8x48xf32> to vector<1x8x48xf32>
    %5 = vector.extract_strided_slice %4 {offsets = [0, 0, 0], sizes = [1, 8, 16], strides = [1, 1, 1]} : vector<1x8x48xf32> to vector<1x8x16xf32>
    %6 = vector.extract_strided_slice %4 {offsets = [0, 0, 16], sizes = [1, 8, 16], strides = [1, 1, 1]} : vector<1x8x48xf32> to vector<1x8x16xf32>
    %7 = vector.extract_strided_slice %4 {offsets = [0, 0, 32], sizes = [1, 8, 16], strides = [1, 1, 1]} : vector<1x8x48xf32> to vector<1x8x16xf32>
    %8 = tpu.iota {dimensions = array<i32: 0>} : vector<8x8xi32>
    %9 = tpu.iota {dimensions = array<i32: 1>} : vector<8x8xi32>
    %10 = arith.cmpi sle, %9, %8 : vector<8x8xi32>
    %cst_4 = arith.constant 0.000000e+00 : f32
    %cst_5 = arith.constant -1.000000e+30 : f32
    %11 = vector.broadcast %cst_4 : f32 to vector<8x8xf32>
    %12 = vector.broadcast %cst_5 : f32 to vector<8x8xf32>
    %13 = arith.select %10, %11, %12 : vector<8x8xi1>, vector<8x8xf32>
    "tpu.trace_start"() <{level = 10 : i32, message = "bqh,bkh->bqk"}> : () -> ()
    %cst_6 = arith.constant dense<0.000000e+00> : vector<1x8x8xf32>
    %14 = tpu.matmul %6, %5, %cst_6 {dimension_numbers = #tpu.dot_dimension_numbers<[2], [2], [1], [1], [0, 0, 0, 1, 1, 1], [0], [0]>} : vector<1x8x16xf32>, vector<1x8x16xf32>, vector<1x8x8xf32> -> vector<1x8x8xf32>
    "tpu.trace_stop"() : () -> ()
    %cst_7 = arith.constant 1.000000e-01 : f32
    %15 = vector.broadcast %cst_7 : f32 to vector<1x8x8xf32>
    %16 = arith.mulf %14, %15 : vector<1x8x8xf32>
    %17 = vector.shape_cast %13 : vector<8x8xf32> to vector<1x8x8xf32>
    %18 = arith.addf %16, %17 : vector<1x8x8xf32>
    %cst_8 = arith.constant dense<0xFF800000> : vector<1x8xf32>
    %19 = vector.multi_reduction <maximumf>, %18, %cst_8 [2] : vector<1x8x8xf32> to vector<1x8xf32>
    %20 = vector.shape_cast %19 : vector<1x8xf32> to vector<1x8x1xf32>
    %21 = vector.broadcast %20 : vector<1x8x1xf32> to vector<1x8x8xf32>
    %22 = arith.subf %18, %21 : vector<1x8x8xf32>
    %23 = math.exp %22 : vector<1x8x8xf32>
    %cst_9 = arith.constant dense<0.000000e+00> : vector<1x8xf32>
    %24 = vector.multi_reduction <add>, %23, %cst_9 [2] : vector<1x8x8xf32> to vector<1x8xf32>
    %25 = vector.shape_cast %24 : vector<1x8xf32> to vector<1x8x1xf32>
    %26 = tpu.reciprocal %25 {approx = true} : vector<1x8x1xf32> -> vector<1x8x1xf32>
    %27 = vector.broadcast %26 : vector<1x8x1xf32> to vector<1x8x8xf32>
    %28 = arith.mulf %23, %27 : vector<1x8x8xf32>
    "tpu.trace_start"() <{level = 10 : i32, message = "bqk,bkh->bqh"}> : () -> ()
    %cst_10 = arith.constant dense<0.000000e+00> : vector<1x8x16xf32>
    %29 = tpu.matmul %28, %7, %cst_10 {dimension_numbers = #tpu.dot_dimension_numbers<[2], [1], [1], [2], [0, 0, 0, 1, 1, 2], [0], [0]>} : vector<1x8x8xf32>, vector<1x8x16xf32>, vector<1x8x16xf32> -> vector<1x8x16xf32>
    "tpu.trace_stop"() : () -> ()
    %c0_11 = arith.constant 0 : index
    %c0_12 = arith.constant 0 : index
    %c0_13 = arith.constant 0 : index
    %30 = vector.load %arg3[%c0_11, %c0_12, %c0_13] : memref<1x8x16xf32, #tpu.memory_space<vmem>>, vector<1x8x16xf32>
    tpu.vector_store %arg3[%c0_11, %c0_12, %c0_13], %29 {strides = array<i32>} : memref<1x8x16xf32, #tpu.memory_space<vmem>>, vector<1x8x16xf32>,
    return
  }
  func.func @transform_0(%arg0: i32) -> (i32, i32, i32) {
    %c0_i32 = arith.constant 0 : i32
    %c0_i32_0 = arith.constant 0 : i32
    %c0_i32_1 = arith.constant 0 : i32
    return %arg0, %c0_i32, %c0_i32_0 : i32, i32, i32
  }
  func.func @transform_1(%arg0: i32) -> (i32, i32) {
    %c0_i32 = arith.constant 0 : i32
    %c0_i32_0 = arith.constant 0 : i32
    %c0_i32_1 = arith.constant 0 : i32
    return %c0_i32, %c0_i32_0 : i32, i32
  }
  func.func @transform_2(%arg0: i32) -> (i32, i32, i32) {
    %c0_i32 = arith.constant 0 : i32
    %c0_i32_0 = arith.constant 0 : i32
    %c0_i32_1 = arith.constant 0 : i32
    return %arg0, %c0_i32, %c0_i32_0 : i32, i32, i32
  }
}

</mosaic_0001>

<llo_original>
// kernel: head_forward.1
$region0: #{head_forward.1}
  #allocation0 [shape = 'u32[]', space=smem, size = 0x4, offset = 0x4, fixed_abs, tag = 'smem constant byte address 0x4 - core index']
  #allocation1 [shape = 'u32[144,128]{1,0:T(1,128)}', space=vmem, size = 0x12000, scoped, tag = 'internal scratch']
  %s0 = inlined_call_operand.vmem [shape: f32[2,8,128], index: 0, kind: input, shape index: {}]
  %s1 = inlined_call_operand.vmem [shape: f32[128,48], index: 1, kind: input, shape index: {}]
  %s2 = inlined_call_operand.hbm [shape: f32[2,8,16], index: 2, kind: output, shape index: {}]
  %s3 = sld [smem:[#allocation0]]
  $region41: #{head_forward.1} parent=0
    _
  %s5 = ssub.s32 1, %s3
  %s6 = scalar_select 0, %s5, %s3
  $region1: #{head_forward.1} parent=0
    #allocation2 [shape = 'u8[8192]{0}', space=vmem, size = 0x2000, scoped, tag = 'output window, operand 0']
    #allocation3 [shape = 's32[2]{0}', space=sflag, size = 0x8, scoped, tag = 'scoped memory for head_forward.1']
    %7 = vsyncpa [#allocation3], 0
    %s8 = scalar_lea.sflag [#allocation3], 1
    %9 = vsyncpa %s8, 0
    loop: start=0, step=1, limit=4
    $region2: #{head_forward.1} parent=1 // loop_pre_header
      _
    $region3: #{head_forward.1} parent=1 // loop_header
      %s11 = sphi 0, %s15
      %p12 = scmp.ge.s32.totalorder %s11, 4
      %s21 = sphi 0, %s23
      %s24 = sphi 0, %s21
      %s25 = sphi 0, %s24
      %s41 = sphi 0, %s25
      %s45 = sphi 0, %s45
      %s47 = sphi 0, %s45
      %s48 = sphi 0, %s47
      %s62 = sphi 0, %s48
      %s68 = sphi 0, %s70
      %s71 = sphi 0, %s68
      %s72 = sphi 0, %s71
      %s88 = sphi 0, %s72
    $region4: #{head_forward.1} parent=1 // loop_header_branch
      %14 = sbr.rel (%p12) target = $region8
    $region5: #{head_forward.1} parent=1 // loop_body
      %s16 = ssub.s32 %s11, 1
      %s17 = ssub.s32 %s11, 2
      %s18 = sadd.s32 %s11, 1
      %s19 = ssub.s32 %s11, %s18
      %p20 = scmp.eq.s32.totalorder %s19, 0
      %s22 = sadd.s32 %s21, 1
      %s23 = scalar_select %p20, %s21, %s22
      %p26 = pneg %p20
      %p27 = scmp.eq.s32.totalorder %s11, 1
      %p28 = por %p26, %p27
      %p29 = scmp.ne.s32.totalorder %s21, %s24
      %p30 = scmp.eq.s32.totalorder %s11, 0
      %p31 = por %p29, %p30
      %p32 = scmp.ne.s32.totalorder %s21, %s24
      %p33 = scmp.eq.s32.totalorder %s16, 1
      %p34 = por %p32, %p33
      %p35 = scmp.ne.s32.totalorder %s24, %s25
      %p36 = scmp.eq.s32.totalorder %s16, 0
      %p37 = por %p35, %p36
      %p38 = scmp.ne.s32.totalorder %s24, %s25
      %p39 = scmp.eq.s32.totalorder %s17, 1
      %p40 = por %p38, %p39
      %p42 = scmp.ne.s32.totalorder %s25, %s41
      %p43 = scmp.eq.s32.totalorder %s17, 0
      %p44 = por %p42, %p43
      %s46 = sadd.s32 %s45, 1
      %p49 = scmp.eq.s32.totalorder %s11, 1
      %p50 = scmp.ne.s32.totalorder %s45, %s47
      %p51 = scmp.eq.s32.totalorder %s11, 0
      %p52 = por %p50, %p51
      %p53 = scmp.ne.s32.totalorder %s45, %s47
      %p54 = scmp.eq.s32.totalorder %s16, 1
      %p55 = por %p53, %p54
      %p56 = scmp.ne.s32.totalorder %s47, %s48
      %p57 = scmp.eq.s32.totalorder %s16, 0
      %p58 = por %p56, %p57
      %p59 = scmp.ne.s32.totalorder %s47, %s48
      %p60 = scmp.eq.s32.totalorder %s17, 1
      %p61 = por %p59, %p60
      %p63 = scmp.ne.s32.totalorder %s48, %s62
      %p64 = scmp.eq.s32.totalorder %s17, 0
      %p65 = por %p63, %p64
      %s66 = ssub.s32 %s11, %s18
      %p67 = scmp.eq.s32.totalorder %s66, 0
      %s69 = sadd.s32 %s68, 1
      %s70 = scalar_select %p67, %s68, %s69
      %p73 = pneg %p67
      %p74 = scmp.eq.s32.totalorder %s11, 1
      %p75 = por %p73, %p74
      %p76 = scmp.ne.s32.totalorder %s68, %s71
      %p77 = scmp.eq.s32.totalorder %s11, 0
      %p78 = por %p76, %p77
      %p79 = scmp.ne.s32.totalorder %s68, %s71
      %p80 = scmp.eq.s32.totalorder %s16, 1
      %p81 = por %p79, %p80
      %p82 = scmp.ne.s32.totalorder %s71, %s72
      %p83 = scmp.eq.s32.totalorder %s16, 0
      %p84 = por %p82, %p83
      %p85 = scmp.ne.s32.totalorder %s71, %s72
      %p86 = scmp.eq.s32.totalorder %s17, 1
      %p87 = por %p85, %p86
      %p89 = scmp.ne.s32.totalorder %s72, %s88
      %p90 = scmp.eq.s32.totalorder %s17, 0
      %p91 = por %p89, %p90
      %p92 = scmp.le.s32.totalorder 1, %s11
      %p93 = scmp.lt.s32.totalorder %s11, 3
      %p94 = pnand %p92, %p93
      %p95 = pneg %p94
      // Predicated region
      $region9: #{head_forward.1} parent=5 // pred_check
        _
      $region10: #{head_forward.1} parent=5 // pred_check_branch
        %97 = sbr.rel (%p94) target = $region12
      $region11: #{head_forward.1} parent=5 // pred_region
        %s98 = ssub.s32 %s11, 1
        // Predicated region
        $region13: #{head_forward.1} parent=11 // pred_check
          %p99 = pneg %p58
        $region14: #{head_forward.1} parent=11 // pred_check_branch
          %101 = sbr.rel (%p99) target = $region16
        $region15: #{head_forward.1} parent=11 // pred_region
          _
        $region16: #{head_forward.1} parent=11 // pred_fallthru
          _
      $region12: #{head_forward.1} parent=5 // pred_fallthru
        _
      %p102 = scmp.lt.s32.totalorder %s11, 2
      // Predicated region
      $region17: #{head_forward.1} parent=5 // pred_check
        %p103 = pneg %p102
      $region18: #{head_forward.1} parent=5 // pred_check_branch
        %105 = sbr.rel (%p103) target = $region20
      $region19: #{head_forward.1} parent=5 // pred_region
        // Predicated region
        $region21: #{head_forward.1} parent=19 // pred_check
          %p106 = pneg %p31
        $region22: #{head_forward.1} parent=19 // pred_check_branch
          %108 = sbr.rel (%p106) target = $region24
        $region23: #{head_forward.1} parent=19 // pred_region
          %p109 = scmp.lt.s32.totalorder %s11, 1
          %s110 = scalar_select %p109, %s11, 1
          %s111 = smul.addr %s110, 8
          %s112 = scalar_lea.vmem %s0, %s111
        $region24: #{head_forward.1} parent=19 // pred_fallthru
          _
      $region20: #{head_forward.1} parent=5 // pred_fallthru
        _
      %p113 = scmp.le.s32.totalorder 1, %s11
      %p114 = scmp.lt.s32.totalorder %s11, 3
      %p115 = pnand %p113, %p114
      %p116 = pneg %p115
      // Predicated region
      $region25: #{head_forward.1} parent=5 // pred_check
        _
      $region26: #{head_forward.1} parent=5 // pred_check_branch
        %118 = sbr.rel (%p115) target = $region28
      $region27: #{head_forward.1} parent=5 // pred_region
        %s119 = ssub.s32 %s11, 1
        %p120 = scmp.lt.s32.totalorder %s16, 1
        %s121 = scalar_select %p120, %s16, 1
        %s122 = smul.addr %s121, 8
        %s123 = scalar_lea.vmem %s0, %s122
        %p124 = pneg %p37
        %p125 = pneg %p34
        %p126 = pneg %p58
        %p127 = pneg %p55
        %p128 = pneg %p84
        %p129 = pneg %p81
        %s130 = sand.u32 %s71, 1
        %s131 = scalar_lea.sflag [#allocation3], %s130
        %s132 = sand.u32 %s71, 1
        %s133 = smul.addr %s132, 8
        %s134 = scalar_lea.vmem [#allocation2], %s133
        %p135 = scmp.lt.s32.totalorder %s16, 1
        %s136 = scalar_select %p135, %s16, 1
        %s137 = smul.addr %s136, 8
        %s138 = scalar_lea.vmem %s0, %s137
        %v139 = vld [vmem:[%s138] sm:$0xff]
        %v140 = vld [vmem:[%s1] sm:$0xff]
        %v141 = vld [vmem:[%s1 + $0x8] sm:$0xff]
        %v142 = vld [vmem:[%s1 + $0x10] sm:$0xff]
        %v143 = vld [vmem:[%s1 + $0x18] sm:$0xff]
        %v144 = vld [vmem:[%s1 + $0x20] sm:$0xff]
        %v145 = vld [vmem:[%s1 + $0x28] sm:$0xff]
        %v146 = vld [vmem:[%s1 + $0x30] sm:$0xff]
        %v147 = vld [vmem:[%s1 + $0x38] sm:$0xff]
        %v148 = vld [vmem:[%s1 + $0x40] sm:$0xff]
        %v149 = vld [vmem:[%s1 + $0x48] sm:$0xff]
        %v150 = vld [vmem:[%s1 + $0x50] sm:$0xff]
        %v151 = vld [vmem:[%s1 + $0x58] sm:$0xff]
        %v152 = vld [vmem:[%s1 + $0x60] sm:$0xff]
        %v153 = vld [vmem:[%s1 + $0x68] sm:$0xff]
        %v154 = vld [vmem:[%s1 + $0x70] sm:$0xff]
        %v155 = vld [vmem:[%s1 + $0x78] sm:$0xff]
        %156 = vmatprep.subr.mxu0 0.0
        %157 = vmatpush1.msra.mxu0 %v140
        %158 = vmatprep.subr.mxu0 0.0
        %159 = vmatpush1.msra.mxu0 %v141
        %160 = vmatprep.subr.mxu0 0.0
        %161 = vmatpush1.msra.mxu0 %v142
        %162 = vmatprep.subr.mxu0 0.0
        %163 = vmatpush1.msra.mxu0 %v143
        %164 = vmatprep.subr.mxu0 0.0
        %165 = vmatpush1.msra.mxu0 %v144
        %166 = vmatprep.subr.mxu0 0.0
        %167 = vmatpush1.msra.mxu0 %v145
        %168 = vmatprep.subr.mxu0 0.0
        %169 = vmatpush1.msra.mxu0 %v146
        %170 = vmatprep.subr.mxu0 0.0
        %171 = vmatpush1.msra.mxu0 %v147
        %172 = vmatprep.subr.mxu0 0.0
        %173 = vmatpush1.msra.mxu0 %v148
        %174 = vmatprep.subr.mxu0 0.0
        %175 = vmatpush1.msra.mxu0 %v149
        %176 = vmatprep.subr.mxu0 0.0
        %177 = vmatpush1.msra.mxu0 %v150
        %178 = vmatprep.subr.mxu0 0.0
        %179 = vmatpush1.msra.mxu0 %v151
        %180 = vmatprep.subr.mxu0 0.0
        %181 = vmatpush1.msra.mxu0 %v152
        %182 = vmatprep.subr.mxu0 0.0
        %183 = vmatpush1.msra.mxu0 %v153
        %184 = vmatprep.subr.mxu0 0.0
        %185 = vmatpush1.msra.mxu0 %v154
        %186 = vmatprep.subr.mxu0 0.0
        %187 = vmatpush1.msra.mxu0 %v155
        %188 = vmatprep.subr.mxu0 0.0
        %189 = vmatpush1.msra.mxu0 0.0
        %190 = vmatprep.subr.mxu0 0.0
        %191 = vmatpush1.msra.mxu0 0.0
        %192 = vmatprep.subr.mxu0 0.0
        %193 = vmatpush1.msra.mxu0 0.0
        %194 = vmatprep.subr.mxu0 0.0
        %195 = vmatpush1.msra.mxu0 0.0
        %196 = vmatprep.subr.mxu0 0.0
        %197 = vmatpush1.msra.mxu0 0.0
        %198 = vmatprep.subr.mxu0 0.0
        %199 = vmatpush1.msra.mxu0 0.0
        %200 = vmatprep.subr.mxu0 0.0
        %201 = vmatpush1.msra.mxu0 0.0
        %202 = vmatprep.subr.mxu0 0.0
        %203 = vmatpush1.msra.mxu0 0.0
        %204 = vmatprep.subr.mxu0 0.0
        %205 = vmatpush1.msra.mxu0 0.0
        %206 = vmatprep.subr.mxu0 0.0
        %207 = vmatpush1.msra.mxu0 0.0
        %208 = vmatprep.subr.mxu0 0.0
        %209 = vmatpush1.msra.mxu0 0.0
        %210 = vmatprep.subr.mxu0 0.0
        %211 = vmatpush1.msra.mxu0 0.0
        %212 = vmatprep.subr.mxu0 0.0
        %213 = vmatpush1.msra.mxu0 0.0
        %214 = vmatprep.subr.mxu0 0.0
        %215 = vmatpush1.msra.mxu0 0.0
        %216 = vmatprep.subr.mxu0 0.0
        %217 = vmatpush1.msra.mxu0 0.0
        %218 = vmatprep.subr.mxu0 0.0
        %219 = vmatpush1.msra.mxu0 0.0
        %220 = vmatprep.mubr.f32.mxu0 0.0
        %221 = vmatmul.mubr.f32.gmra.mrb[0].mxu0 %v139
        %v222 = vpop.f32.mrb[0].mxu0
        %v223 = vadd.f32 0.0, %v222
        %v224 = vpop.f32.mrb[0].mxu0
        %225 = vdwg.mxu0
        %v226 = vlaneseq
        %v227 = vshrl.u32 %v226, 7
        %v228 = vlaneseq
        %v229 = vand.u32 %v228, 127
        %vm230 = vcmp.le.s32.totalorder %v229, %v227
        %v231 = vsel %vm230, 0.0, -1e+30
        %233 = vrot.lane.b32.xlu0 %v223, 112
        %v234 = vpop.permute.xlu0 %233
        %vm235 = vcmask 130048
        %v236 = vsel %vm235, %v234, 0
        %v238 = vsel %vm235, %v223, 0
        %240 = vmatprep.subr.mxu0 0.0
        %241 = vmatpush1.xpose.msra.mxu0 %v238
        %242 = vmatprep.subr.mxu0 0.0
        %243 = vmatpush1.xpose.msra.mxu0 0.0
        %244 = vmatprep.subr.mxu0 0.0
        %245 = vmatpush1.xpose.msra.mxu0 0.0
        %246 = vmatprep.subr.mxu0 0.0
        %247 = vmatpush1.xpose.msra.mxu0 0.0
        %248 = vmatprep.subr.mxu0 0.0
        %249 = vmatpush1.xpose.msra.mxu0 0.0
        %250 = vmatprep.subr.mxu0 0.0
        %251 = vmatpush1.xpose.msra.mxu0 0.0
        %252 = vmatprep.subr.mxu0 0.0
        %253 = vmatpush1.xpose.msra.mxu0 0.0
        %254 = vmatprep.subr.mxu0 0.0
        %255 = vmatpush1.xpose.msra.mxu0 0.0
        %256 = vmatprep.subr.mxu0 0.0
        %257 = vmatpush1.xpose.msra.mxu0 0.0
        %258 = vmatprep.subr.mxu0 0.0
        %259 = vmatpush1.xpose.msra.mxu0 0.0
        %260 = vmatprep.subr.mxu0 0.0
        %261 = vmatpush1.xpose.msra.mxu0 0.0
        %262 = vmatprep.subr.mxu0 0.0
        %263 = vmatpush1.xpose.msra.mxu0 0.0
        %264 = vmatprep.subr.mxu0 0.0
        %265 = vmatpush1.xpose.msra.mxu0 0.0
        %266 = vmatprep.subr.mxu0 0.0
        %267 = vmatpush1.xpose.msra.mxu0 0.0
        %268 = vmatprep.subr.mxu0 0.0
        %269 = vmatpush1.xpose.msra.mxu0 0.0
        %270 = vmatprep.subr.mxu0 0.0
        %271 = vmatpush1.xpose.msra.mxu0 0.0
        %272 = vmatprep.subr.mxu0 0.0
        %273 = vmatpush1.xpose.msra.mxu0 0.0
        %274 = vmatprep.subr.mxu0 0.0
        %275 = vmatpush1.xpose.msra.mxu0 0.0
        %276 = vmatprep.subr.mxu0 0.0
        %277 = vmatpush1.xpose.msra.mxu0 0.0
        %278 = vmatprep.subr.mxu0 0.0
        %279 = vmatpush1.xpose.msra.mxu0 0.0
        %280 = vmatprep.subr.mxu0 0.0
        %281 = vmatpush1.xpose.msra.mxu0 0.0
        %282 = vmatprep.subr.mxu0 0.0
        %283 = vmatpush1.xpose.msra.mxu0 0.0
        %284 = vmatprep.subr.mxu0 0.0
        %285 = vmatpush1.xpose.msra.mxu0 0.0
        %286 = vmatprep.subr.mxu0 0.0
        %287 = vmatpush1.xpose.msra.mxu0 0.0
        %288 = vmatprep.subr.mxu0 0.0
        %289 = vmatpush1.xpose.msra.mxu0 0.0
        %290 = vmatprep.subr.mxu0 0.0
        %291 = vmatpush1.xpose.msra.mxu0 0.0
        %292 = vmatprep.subr.mxu0 0.0
        %293 = vmatpush1.xpose.msra.mxu0 0.0
        %294 = vmatprep.subr.mxu0 0.0
        %295 = vmatpush1.xpose.msra.mxu0 0.0
        %296 = vmatprep.subr.mxu0 0.0
        %297 = vmatpush1.xpose.msra.mxu0 0.0
        %298 = vmatprep.subr.mxu0 0.0
        %299 = vmatpush1.xpose.msra.mxu0 0.0
        %300 = vmatprep.subr.mxu0 0.0
        %301 = vmatpush1.xpose.msra.mxu0 0.0
        %302 = vmatprep.subr.mxu0 0.0
        %303 = vmatpush1.xpose.msra.mxu0 0.0
        %304 = vmatprep.mubr.f32.mxu0 0.0
        %305 = vmatmul.mubr.f32.gmra.mrb[0].mxu0 %v236
        %v306 = vpop.f32.mrb[0].mxu0
        %v307 = vadd.f32 0.0, %v306
        %v308 = vpop.f32.mrb[0].mxu0
        %309 = vdwg.mxu0
        %v310 = vmul.f32 %v307, 0.1
        %v311 = vadd.f32 %v310, %v231
        %vm312 = vcmask 64512
        %v313 = vsel %vm312, %v311, -inf
        %314 = vmax.xlane.f32.xlu0 %v313
        %v315 = vpop.xlane.xlu0 %314
        %v316 = vsub.f32 %v311, %v315
        %v317 = vmul.f32 %v316, 1.442695
        %v318 = vpow.pop %v317
        %v319 = vsel %vm312, %v318, 0.0
        %320 = vadd.xlane.f32.xlu0 %v319
        %v321 = vpop.xlane.xlu0 %320
        %v322 = vrcp.pop %v321
        %v323 = vmul.f32 %v318, %v322
        %324 = vrot.lane.b32.xlu0 %v223, 96
        %v325 = vpop.permute.xlu0 %324
        %v328 = vsel %vm312, %v323, 0
        %330 = vmatprep.subr.mxu0 0.0
        %331 = vmatpush1.msra.mxu0 %v325
        %332 = vmatprep.subr.mxu0 0.0
        %333 = vmatpush1.msra.mxu0 0.0
        %334 = vmatprep.subr.mxu0 0.0
        %335 = vmatpush1.msra.mxu0 0.0
        %336 = vmatprep.subr.mxu0 0.0
        %337 = vmatpush1.msra.mxu0 0.0
        %338 = vmatprep.subr.mxu0 0.0
        %339 = vmatpush1.msra.mxu0 0.0
        %340 = vmatprep.subr.mxu0 0.0
        %341 = vmatpush1.msra.mxu0 0.0
        %342 = vmatprep.subr.mxu0 0.0
        %343 = vmatpush1.msra.mxu0 0.0
        %344 = vmatprep.subr.mxu0 0.0
        %345 = vmatpush1.msra.mxu0 0.0
        %346 = vmatprep.subr.mxu0 0.0
        %347 = vmatpush1.msra.mxu0 0.0
        %348 = vmatprep.subr.mxu0 0.0
        %349 = vmatpush1.msra.mxu0 0.0
        %350 = vmatprep.subr.mxu0 0.0
        %351 = vmatpush1.msra.mxu0 0.0
        %352 = vmatprep.subr.mxu0 0.0
        %353 = vmatpush1.msra.mxu0 0.0
        %354 = vmatprep.subr.mxu0 0.0
        %355 = vmatpush1.msra.mxu0 0.0
        %356 = vmatprep.subr.mxu0 0.0
        %357 = vmatpush1.msra.mxu0 0.0
        %358 = vmatprep.subr.mxu0 0.0
        %359 = vmatpush1.msra.mxu0 0.0
        %360 = vmatprep.subr.mxu0 0.0
        %361 = vmatpush1.msra.mxu0 0.0
        %362 = vmatprep.subr.mxu0 0.0
        %363 = vmatpush1.msra.mxu0 0.0
        %364 = vmatprep.subr.mxu0 0.0
        %365 = vmatpush1.msra.mxu0 0.0
        %366 = vmatprep.subr.mxu0 0.0
        %367 = vmatpush1.msra.mxu0 0.0
        %368 = vmatprep.subr.mxu0 0.0
        %369 = vmatpush1.msra.mxu0 0.0
        %370 = vmatprep.subr.mxu0 0.0
        %371 = vmatpush1.msra.mxu0 0.0
        %372 = vmatprep.subr.mxu0 0.0
        %373 = vmatpush1.msra.mxu0 0.0
        %374 = vmatprep.subr.mxu0 0.0
        %375 = vmatpush1.msra.mxu0 0.0
        %376 = vmatprep.subr.mxu0 0.0
        %377 = vmatpush1.msra.mxu0 0.0
        %378 = vmatprep.subr.mxu0 0.0
        %379 = vmatpush1.msra.mxu0 0.0
        %380 = vmatprep.subr.mxu0 0.0
        %381 = vmatpush1.msra.mxu0 0.0
        %382 = vmatprep.subr.mxu0 0.0
        %383 = vmatpush1.msra.mxu0 0.0
        %384 = vmatprep.subr.mxu0 0.0
        %385 = vmatpush1.msra.mxu0 0.0
        %386 = vmatprep.subr.mxu0 0.0
        %387 = vmatpush1.msra.mxu0 0.0
        %388 = vmatprep.subr.mxu0 0.0
        %389 = vmatpush1.msra.mxu0 0.0
        %390 = vmatprep.subr.mxu0 0.0
        %391 = vmatpush1.msra.mxu0 0.0
        %392 = vmatprep.subr.mxu0 0.0
        %393 = vmatpush1.msra.mxu0 0.0
        %394 = vmatprep.mubr.f32.mxu0 0.0
        %395 = vmatmul.mubr.f32.gmra.mrb[0].mxu0 %v328
        %v396 = vpop.f32.mrb[0].mxu0
        %v397 = vadd.f32 0.0, %v396
        %v398 = vpop.f32.mrb[0].mxu0
        %399 = vdwg.mxu0
        %400 = vst.msk [vmem:[%s134] sm:$0xff] %vm235, %v397
        %s401 = sand.u32 %s71, 1
        %s402 = scalar_lea.sflag [#allocation3], %s401
        %s403 = sand.u32 %s71, 1
        %s404 = smul.addr %s403, 8
        %s405 = scalar_lea.vmem [#allocation2], %s404
        // Predicated region
        $region29: #{head_forward.1} parent=27 // pred_check
          %p406 = pneg %p81
        $region30: #{head_forward.1} parent=27 // pred_check_branch
          %408 = sbr.rel (%p406) target = $region32
        $region31: #{head_forward.1} parent=27 // pred_region
          %s410 = ssub.s32 128, 128
          %411 = vsyncadd %s402, %s410
          %s412 = smul.addr %s16, 128
          %s413 = scalar_lea.hbm %s2, %s412
          %s415 = sshll.u32 %s405, 4
          %s416 = int_to_ptr.vmem [resolvable:$true] %s415
          %418 = dma.vmem_to_hbm [thread:$0]  %s416, 128, %s413, %s402
        $region32: #{head_forward.1} parent=27 // pred_fallthru
          _
      $region28: #{head_forward.1} parent=5 // pred_fallthru
        _
      %p419 = scmp.le.s32.totalorder 2, %s11
      // Predicated region
      $region33: #{head_forward.1} parent=5 // pred_check
        %p420 = pneg %p419
      $region34: #{head_forward.1} parent=5 // pred_check_branch
        %422 = sbr.rel (%p420) target = $region36
      $region35: #{head_forward.1} parent=5 // pred_region
        %s423 = ssub.s32 %s11, 2
        // Predicated region
        $region37: #{head_forward.1} parent=35 // pred_check
          %p424 = pneg %p87
        $region38: #{head_forward.1} parent=35 // pred_check_branch
          %426 = sbr.rel (%p424) target = $region40
        $region39: #{head_forward.1} parent=35 // pred_region
          %s427 = sand.u32 %s72, 1
          %s428 = scalar_lea.sflag [#allocation3], %s427
          %s429 = sand.u32 %s72, 1
          %s430 = smul.addr %s429, 8
          %s431 = scalar_lea.vmem [#allocation2], %s430
          %432 = dma.done %s428, 128
        $region40: #{head_forward.1} parent=35 // pred_fallthru
          _
      $region36: #{head_forward.1} parent=5 // pred_fallthru
        _
    $region6: #{head_forward.1} parent=1 // loop_footer
      %s15 = sadd.s32 1, %s11
    $region7: #{head_forward.1} parent=1 // loop_footer_branch
      %10 = sbr.rel target = $region3
    $region8: #{head_forward.1} parent=1 // loop_exit
      _
    %433 = vsyncpa [#allocation3], 1
    %s434 = scalar_lea.sflag [#allocation3], 1
    %435 = vsyncpa %s434, 1

</llo_original>
